<compile_context>
chip_gen: v7x
topology: tpu7x:2x2x1
jax: 0.10.0
libtpu: 0.0.40
codegen_flags: <defaults>
</compile_context>

<pallas_src>
import functools
from typing import NamedTuple

import jax
import jax.numpy as jnp
from jax import lax
from jax.experimental import pallas as pl
from jax.experimental.pallas import tpu as pltpu


# --------------------------------------------------------------------------- #
# Helpers
# --------------------------------------------------------------------------- #
def _round_up(x: int, m: int) -> int:
    return (x + m - 1) // m * m


def _device_kind() -> str:
    try:
        return jax.devices()[0].device_kind.lower()
    except Exception:  # pragma: no cover - defensive
        return ""


def _is_multi_core_chip() -> bool:
    # v7x has 2 TensorCores per chip; v5e/v6e have 1.
    return "7" in _device_kind()


def _vmem_limit_bytes() -> int:
    # v7x: 64 MiB physical VMEM per TC -> keep headroom.  v5e/v6e: 128 MiB physical.
    if _is_multi_core_chip():
        return 48 * 1024 * 1024
    kind = _device_kind()
    if "v5" in kind or "v6" in kind:
        return 96 * 1024 * 1024
    return 48 * 1024 * 1024  # safe default on unknown hardware


def _pick_tn(N: int, multi_core: bool) -> int:
    """Lane-dense output tile width: minimize N padding, then break ties by
    preferring more column tiles on multi-TC chips (megacore) and fewer grid
    steps on single-TC chips."""
    n_cap = _round_up(N, 128)
    cands = []
    for tn_c in (512, 384, 256, 128):
        if tn_c > n_cap:
            continue
        cands.append((_round_up(N, tn_c), tn_c))
    min_pad = min(p for p, _ in cands)
    tied = [t for p, t in cands if p == min_pad]
    return min(tied) if multi_core else max(tied)


def _pick_tm(M: int, m_align: int) -> int:
    if M <= 128:
        return _round_up(M, m_align)
    # Keep large row tiles multiples of 128 so the epilogue strip-mining divides evenly.
    return min(512, _round_up(M, 128))


# --------------------------------------------------------------------------- #
# Parameter preparation (one-time; hoisted out of the forward pass)
# --------------------------------------------------------------------------- #
class ResidualBlockParams(NamedTuple):
    w_fc: jax.Array   # (K_pad, N_pad) compute_dtype
    w_sc: jax.Array   # (K_pad, N_pad) compute_dtype
    b_fc: jax.Array   # (1, N_pad) f32
    b_sc: jax.Array   # (1, N_pad) f32
    alpha: jax.Array  # (1,) f32  (PReLU scalar; lives in SMEM inside the kernel)


class BlockConfig(NamedTuple):
    K: int
    N: int
    K_pad: int
    N_pad: int
    tk: int
    tn: int
    compute_dtype: str
    multi_core: bool


def prepare_residual_block(w_fc, b_fc, w_sc, b_sc, alpha, *,
                           compute_dtype=jnp.bfloat16):
    """One-time weight preparation (pad to tile multiples + cast operands).

    w_fc, w_sc: (K, N) weights, already transposed from nn.Linear's (N, K).
    b_fc, b_sc: (N,) biases.  alpha: scalar PReLU parameter.
    compute_dtype: MXU operand dtype (default bf16; accumulation is always f32).
    """
    K, N = w_fc.shape
    assert w_sc.shape == (K, N), f"shortcut weight shape {w_sc.shape} != {(K, N)}"

    multi_core = _is_multi_core_chip()
    tk = min(1024, _round_up(K, 128))
    tn = _pick_tn(N, multi_core)
    K_pad = _round_up(K, tk)
    N_pad = _round_up(N, tn)

    cd = jnp.dtype(compute_dtype)
    padw = ((0, K_pad - K), (0, N_pad - N))
    wf = jnp.pad(jnp.asarray(w_fc, jnp.float32), padw).astype(cd)
    ws = jnp.pad(jnp.asarray(w_sc, jnp.float32), padw).astype(cd)
    bf = jnp.pad(jnp.asarray(b_fc, jnp.float32).reshape(1, N), ((0, 0), (0, N_pad - N)))
    bs = jnp.pad(jnp.asarray(b_sc, jnp.float32).reshape(1, N), ((0, 0), (0, N_pad - N)))
    alpha_arr = jnp.asarray(alpha, jnp.float32).reshape((1,))

    params = ResidualBlockParams(wf, ws, bf, bs, alpha_arr)
    cfg = BlockConfig(K=K, N=N, K_pad=K_pad, N_pad=N_pad, tk=tk, tn=tn,
                      compute_dtype=cd.name, multi_core=multi_core)
    return params, cfg


# --------------------------------------------------------------------------- #
# Kernels
# --------------------------------------------------------------------------- #
def _residual_block_kernel_single(x_ref, wf_ref, ws_ref, bf_ref, bs_ref,
                                  alpha_ref, o_ref):
    """gk == 1 specialization: no VMEM accumulator, no pl.when phases.

    x_ref:  (tm, tk)      wf_ref/ws_ref: (tk, tn)      bf/bs: (1, tn) f32
    alpha_ref: (1,) SMEM  o_ref: (tm, tn) lane-dense
    """
    x = x_ref[...]
    fc = jnp.dot(x, wf_ref[...], preferred_element_type=jnp.float32) + bf_ref[...]
    sc = jnp.dot(x, ws_ref[...], preferred_element_type=jnp.float32) + bs_ref[...]
    a = alpha_ref[0]
    act = jnp.where(fc >= 0.0, fc, a * fc)       # PReLU (single shared alpha)
    # Dropout(0.1): identity in eval mode.
    o_ref[...] = (act + sc).astype(o_ref.dtype)


def _residual_block_kernel_multi(x_ref, wf_ref, ws_ref, bf_ref, bs_ref,
                                 alpha_ref, o_ref, acc_fc_ref, acc_sc_ref, *,
                                 strip):
    """K-reduction path (grid axis 2). Two f32 accumulators (fc / shortcut),
    bias folded into the k==0 init, strip-mined epilogue at k==last."""
    k = pl.program_id(2)

    @pl.when(k == 0)
    def _init():
        acc_fc_ref[...] = jnp.broadcast_to(bf_ref[...], acc_fc_ref.shape).astype(jnp.float32)
        acc_sc_ref[...] = jnp.broadcast_to(bs_ref[...], acc_sc_ref.shape).astype(jnp.float32)

    x = x_ref[...]
    acc_fc_ref[...] += jnp.dot(x, wf_ref[...], preferred_element_type=jnp.float32)
    acc_sc_ref[...] += jnp.dot(x, ws_ref[...], preferred_element_type=jnp.float32)

    @pl.when(k == pl.num_programs(2) - 1)
    def _finalize():
        a = alpha_ref[0]
        tm = o_ref.shape[0]
        n_strips = tm // strip  # tm > 128 is always a multiple of 128 == strip

        def body(s, carry):
            r0 = pl.multiple_of(s * strip, strip)
            fc = acc_fc_ref[pl.ds(r0, strip), :]
            sc = acc_sc_ref[pl.ds(r0, strip), :]
            act = jnp.where(fc >= 0.0, fc, a * fc)     # PReLU
            # Dropout(0.1): identity in eval mode.
            o_ref[pl.ds(r0, strip), :] = (act + sc).astype(o_ref.dtype)
            return carry

        lax.fori_loop(0, n_strips, body, 0, unroll=True)


# --------------------------------------------------------------------------- #
# Forward pass
# --------------------------------------------------------------------------- #
@functools.partial(jax.jit, static_argnames=("cfg",))
def residual_block_apply(x, params: ResidualBlockParams, *, cfg: BlockConfig):
    """ResidualBlock forward (eval mode).  x: (M, K) activations."""
    M, Kx = x.shape
    assert Kx == cfg.K, f"x feature dim {Kx} != prepared K {cfg.K}"

    compute_dtype = jnp.dtype(cfg.compute_dtype)
    m_align = 16 if compute_dtype.itemsize == 2 else 8

    tm = _pick_tm(M, m_align)
    M_pad = _round_up(M, tm)
    gm = M_pad // tm
    gn = cfg.N_pad // cfg.tn
    gk = cfg.K_pad // cfg.tk

    # On a 2-TC chip (v7x), expose >= 2 "parallel" programs when the shape allows:
    # halve the row tile if the parallel grid would otherwise collapse to 1 program.
    if cfg.multi_core and gm * gn == 1:
        half = tm // 2
        if half >= 128:
            new_tm = _round_up(half, 128)
        elif half >= m_align:
            new_tm = _round_up(half, m_align)
        else:
            new_tm = tm
        if new_tm < tm:
            tm = new_tm
            M_pad = _round_up(M, tm)
            gm = M_pad // tm

    # Only the activations are padded per call (weights were padded once in prepare).
    xp = jnp.pad(x, ((0, M_pad - M), (0, cfg.K_pad - Kx))).astype(compute_dtype)

    # Advisory cost (actual, not padded, dims for flops).
    w_bytes = params.w_fc.size * params.w_fc.dtype.itemsize * 2
    cost = pl.CostEstimate(
        flops=2 * 2 * M * Kx * cfg.N,
        transcendentals=0,
        bytes_accessed=(xp.size * xp.dtype.itemsize + w_bytes
                        + M * cfg.N * x.dtype.itemsize),
    )

    tk, tn = cfg.tk, cfg.tn
    if gk == 1:
        kernel = _residual_block_kernel_single
        grid = (gm, gn)
        in_specs = [
            pl.BlockSpec((tm, tk), lambda i, j: (i, 0)),            # x
            pl.BlockSpec((tk, tn), lambda i, j: (0, j)),            # w_fc
            pl.BlockSpec((tk, tn), lambda i, j: (0, j)),            # w_sc
            pl.BlockSpec((1, tn), lambda i, j: (0, j)),             # b_fc
            pl.BlockSpec((1, tn), lambda i, j: (0, j)),             # b_sc
            pl.BlockSpec(memory_space=pltpu.MemorySpace.SMEM),      # alpha (scalar)
        ]
        out_specs = pl.BlockSpec((tm, tn), lambda i, j: (i, j))
        scratch_shapes = []
        dim_sems = ("parallel", "parallel")
    else:
        strip = min(tm, 128)
        kernel = functools.partial(_residual_block_kernel_multi, strip=strip)
        grid = (gm, gn, gk)
        in_specs = [
            pl.BlockSpec((tm, tk), lambda i, j, k: (i, k)),         # x
            pl.BlockSpec((tk, tn), lambda i, j, k: (k, j)),         # w_fc
            pl.BlockSpec((tk, tn), lambda i, j, k: (k, j)),         # w_sc
            pl.BlockSpec((1, tn), lambda i, j, k: (0, j)),          # b_fc
            pl.BlockSpec((1, tn), lambda i, j, k: (0, j)),          # b_sc
            pl.BlockSpec(memory_space=pltpu.MemorySpace.SMEM),      # alpha (scalar)
        ]
        out_specs = pl.BlockSpec((tm, tn), lambda i, j, k: (i, j))
        scratch_shapes = [pltpu.VMEM((tm, tn), jnp.float32),        # acc fc
                          pltpu.VMEM((tm, tn), jnp.float32)]        # acc shortcut
        dim_sems = ("parallel", "parallel", "arbitrary")

    out_padded = pl.pallas_call(
        kernel,
        out_shape=jax.ShapeDtypeStruct((M_pad, cfg.N_pad), x.dtype),
        grid_spec=pltpu.PrefetchScalarGridSpec(
            num_scalar_prefetch=0,
            grid=grid,
            in_specs=in_specs,
            out_specs=out_specs,
            scratch_shapes=scratch_shapes,
        ),
        compiler_params=pltpu.CompilerParams(
            dimension_semantics=dim_sems,
            vmem_limit_bytes=_vmem_limit_bytes(),
        ),
        cost_estimate=cost,
    )(xp, params.w_fc, params.w_sc, params.b_fc, params.b_sc, params.alpha)

    return out_padded[:M, :cfg.N]


# --------------------------------------------------------------------------- #
# Reference + self-test
# --------------------------------------------------------------------------- #
def _reference(x, w_fc, b_fc, w_sc, b_sc, alpha):
    fc = x @ w_fc + b_fc.reshape(1, -1)
    act = jnp.where(fc >= 0.0, fc, alpha * fc)
    return act + (x @ w_sc + b_sc.reshape(1, -1))


if __name__ == "__main__":
    key = jax.random.PRNGKey(0)

    def make_case(key, batch, in_features, out_features):
        kx, kwf, kbf, kws, kbs = jax.random.split(key, 5)
        x = jax.random.normal(kx, (batch, in_features), jnp.float32)
        bound = 1.0 / jnp.sqrt(jnp.float32(in_features))
        w_fc = jax.random.uniform(kwf, (in_features, out_features), jnp.float32, -bound, bound)
        b_fc = jax.random.uniform(kbf, (out_features,), jnp.float32, -bound, bound)
        w_sc = jax.random.uniform(kws, (in_features, out_features), jnp.float32, -bound, bound)
        b_sc = jax.random.uniform(kbs, (out_features,), jnp.float32, -bound, bound)
        return x, w_fc, b_fc, w_sc, b_sc

    alpha = jnp.float32(0.25)  # PReLU default init
    k1, k2, k3 = jax.random.split(key, 3)

    # Case 1: nominal small module shapes, exact f32 operand path (gk == 1).
    x1, wf1, bf1, ws1, bs1 = make_case(k1, batch=8, in_features=32, out_features=64)
    params1, cfg1 = prepare_residual_block(wf1, bf1, ws1, bs1, alpha,
                                           compute_dtype=jnp.float32)
    out1 = residual_block_apply(x1, params1, cfg=cfg1)
    jax.block_until_ready(out1)
    ref1 = _reference(x1, wf1, bf1, ws1, bs1, 0.25)
    assert out1.shape == ref1.shape, f"shape mismatch: {out1.shape} vs {ref1.shape}"
    assert jnp.allclose(out1, ref1, atol=1e-4, rtol=1e-4), "case1 (f32) mismatch"

    # Case 2: non-tile-multiple shapes, default bf16 operands (f32 accumulation).
    x2, wf2, bf2, ws2, bs2 = make_case(k2, batch=10, in_features=200, out_features=300)
    params2, cfg2 = prepare_residual_block(wf2, bf2, ws2, bs2, alpha)  # bf16 default
    out2 = residual_block_apply(x2, params2, cfg=cfg2)
    jax.block_until_ready(out2)
    ref2 = _reference(x2, wf2, bf2, ws2, bs2, 0.25)
    assert out2.shape == ref2.shape, f"shape mismatch: {out2.shape} vs {ref2.shape}"
    assert jnp.allclose(out2, ref2, atol=2e-2, rtol=2e-2), "case2 (bf16) mismatch"

    # Case 3: K > tk exercises the multi-k accumulator path + strip-mined epilogue.
    x3, wf3, bf3, ws3, bs3 = make_case(k3, batch=32, in_features=2048, out_features=256)
    params3, cfg3 = prepare_residual_block(wf3, bf3, ws3, bs3, alpha)  # bf16 default
    out3 = residual_block_apply(x3, params3, cfg=cfg3)
    jax.block_until_ready(out3)
    ref3 = _reference(x3, wf3, bf3, ws3, bs3, 0.25)
    assert out3.shape == ref3.shape, f"shape mismatch: {out3.shape} vs {ref3.shape}"
    assert jnp.allclose(out3, ref3, atol=2e-2, rtol=2e-2), "case3 (multi-k bf16) mismatch"

    print("KERNEL_OK")
</pallas_src>

<mosaic_0001>
module attributes {stable_mosaic.version = 11 : i64} {
  func.func @_residual_block_kernel_single(%arg0: i32, %arg1: i32, %arg2: memref<8x128xf32, #tpu.memory_space<vmem>>, %arg3: memref<128x128xf32, #tpu.memory_space<vmem>>, %arg4: memref<128x128xf32, #tpu.memory_space<vmem>>, %arg5: memref<1x128xf32, #tpu.memory_space<vmem>>, %arg6: memref<1x128xf32, #tpu.memory_space<vmem>>, %arg7: memref<1xf32, #tpu.memory_space<smem>>, %arg8: memref<8x128xf32, #tpu.memory_space<vmem>>) attributes {dimension_semantics = [#tpu.dimension_semantics<parallel>, #tpu.dimension_semantics<parallel>], iteration_bounds = array<i64: 1, 1>, scalar_prefetch = 0 : i64, scratch_operands = 0 : i64, tpu.core_type = #tpu.core_type<tc>, window_params = [{transform_indices = @transform_0, window_bounds = array<i64: 8, 128>}, {transform_indices = @transform_1, window_bounds = array<i64: 128, 128>}, {transform_indices = @transform_2, window_bounds = array<i64: 128, 128>}, {transform_indices = @transform_3, window_bounds = array<i64: 1, 128>}, {transform_indices = @transform_4, window_bounds = array<i64: 1, 128>}, {transform_indices = @transform_5, window_bounds = array<i64: 1>}, {transform_indices = @transform_6, window_bounds = array<i64: 8, 128>}]} {
    %c0 = arith.constant 0 : index
    %c0_0 = arith.constant 0 : index
    %0 = vector.load %arg2[%c0, %c0_0] : memref<8x128xf32, #tpu.memory_space<vmem>>, vector<8x128xf32>
    %c0_1 = arith.constant 0 : index
    %c0_2 = arith.constant 0 : index
    %1 = vector.load %arg3[%c0_1, %c0_2] : memref<128x128xf32, #tpu.memory_space<vmem>>, vector<128x128xf32>
    %cst = arith.constant dense<0.000000e+00> : vector<8x128xf32>
    %2 = tpu.matmul %0, %1, %cst {dimension_numbers = #tpu.dot_dimension_numbers<[1], [0], [0], [1], [0, 0, 1, 1], [], []>} : vector<8x128xf32>, vector<128x128xf32>, vector<8x128xf32> -> vector<8x128xf32>
    %c0_3 = arith.constant 0 : index
    %c0_4 = arith.constant 0 : index
    %3 = vector.load %arg5[%c0_3, %c0_4] : memref<1x128xf32, #tpu.memory_space<vmem>>, vector<1x128xf32>
    %4 = vector.broadcast %3 : vector<1x128xf32> to vector<8x128xf32>
    %5 = arith.addf %2, %4 : vector<8x128xf32>
    %c0_5 = arith.constant 0 : index
    %c0_6 = arith.constant 0 : index
    %6 = vector.load %arg4[%c0_5, %c0_6] : memref<128x128xf32, #tpu.memory_space<vmem>>, vector<128x128xf32>
    %cst_7 = arith.constant dense<0.000000e+00> : vector<8x128xf32>
    %7 = tpu.matmul %0, %6, %cst_7 {dimension_numbers = #tpu.dot_dimension_numbers<[1], [0], [0], [1], [0, 0, 1, 1], [], []>} : vector<8x128xf32>, vector<128x128xf32>, vector<8x128xf32> -> vector<8x128xf32>
    %c0_8 = arith.constant 0 : index
    %c0_9 = arith.constant 0 : index
    %8 = vector.load %arg6[%c0_8, %c0_9] : memref<1x128xf32, #tpu.memory_space<vmem>>, vector<1x128xf32>
    %9 = vector.broadcast %8 : vector<1x128xf32> to vector<8x128xf32>
    %10 = arith.addf %7, %9 : vector<8x128xf32>
    %c0_10 = arith.constant 0 : index
    %11 = memref.load %arg7[%c0_10] : memref<1xf32, #tpu.memory_space<smem>>
    %cst_11 = arith.constant 0.000000e+00 : f32
    %12 = vector.broadcast %cst_11 : f32 to vector<8x128xf32>
    %13 = arith.cmpf oge, %5, %12 : vector<8x128xf32>
    %14 = vector.broadcast %11 : f32 to vector<8x128xf32>
    %15 = arith.mulf %14, %5 : vector<8x128xf32>
    %16 = arith.select %13, %5, %15 : vector<8x128xi1>, vector<8x128xf32>
    %17 = arith.addf %16, %10 : vector<8x128xf32>
    %c0_12 = arith.constant 0 : index
    %c0_13 = arith.constant 0 : index
    %18 = vector.load %arg8[%c0_12, %c0_13] : memref<8x128xf32, #tpu.memory_space<vmem>>, vector<8x128xf32>
    tpu.vector_store %arg8[%c0_12, %c0_13], %17 {strides = array<i32>} : memref<8x128xf32, #tpu.memory_space<vmem>>, vector<8x128xf32>,
    return
  }
  func.func @transform_0(%arg0: i32, %arg1: i32) -> (i32, i32) {
    %c0_i32 = arith.constant 0 : i32
    %c0_i32_0 = arith.constant 0 : i32
    return %arg0, %c0_i32 : i32, i32
  }
  func.func @transform_1(%arg0: i32, %arg1: i32) -> (i32, i32) {
    %c0_i32 = arith.constant 0 : i32
    %c0_i32_0 = arith.constant 0 : i32
    return %c0_i32, %arg1 : i32, i32
  }
  func.func @transform_2(%arg0: i32, %arg1: i32) -> (i32, i32) {
    %c0_i32 = arith.constant 0 : i32
    %c0_i32_0 = arith.constant 0 : i32
    return %c0_i32, %arg1 : i32, i32
  }
  func.func @transform_3(%arg0: i32, %arg1: i32) -> (i32, i32) {
    %c0_i32 = arith.constant 0 : i32
    %c0_i32_0 = arith.constant 0 : i32
    return %c0_i32, %arg1 : i32, i32
  }
  func.func @transform_4(%arg0: i32, %arg1: i32) -> (i32, i32) {
    %c0_i32 = arith.constant 0 : i32
    %c0_i32_0 = arith.constant 0 : i32
    return %c0_i32, %arg1 : i32, i32
  }
  func.func @transform_5(%arg0: i32, %arg1: i32) -> i32 {
    %c0_i32 = arith.constant 0 : i32
    %c0_i32_0 = arith.constant 0 : i32
    return %c0_i32 : i32
  }
  func.func @transform_6(%arg0: i32, %arg1: i32) -> (i32, i32) {
    %c0_i32 = arith.constant 0 : i32
    return %arg0, %arg1 : i32, i32
  }
}

</mosaic_0001>

<llo_original>
// kernel: residual_block_apply.1
$region0: #{residual_block_apply.1}
  #allocation0 [shape = 'u32[]', space=smem, size = 0x4, offset = 0x4, fixed_abs, tag = 'smem constant byte address 0x4 - core index']
  #allocation1 [shape = 'u32[144,128]{1,0:T(1,128)}', space=vmem, size = 0x12000, scoped, tag = 'internal scratch']
  #allocation2 [shape = 'f32[1]{0:T(128)S(6)}', space=smem, size = 0x200, scoped, tag = 'scoped memory for residual_block_apply.1']
  %s0 = inlined_call_operand.vmem [shape: f32[8,128], index: 0, kind: input, shape index: {}]
  %s1 = inlined_call_operand.hbm [shape: f32[128,128], index: 1, kind: input, shape index: {}]
  %s2 = inlined_call_operand.hbm [shape: f32[128,128], index: 2, kind: input, shape index: {}]
  %s3 = inlined_call_operand.vmem [shape: f32[1,128], index: 3, kind: input, shape index: {}]
  %s4 = inlined_call_operand.vmem [shape: f32[1,128], index: 4, kind: input, shape index: {}]
  %s5 = inlined_call_operand.<no memory space> [shape: f32[1], index: 5, kind: input, shape index: {}]
  %s6 = inlined_call_operand.hbm [shape: f32[8,128], index: 6, kind: output, shape index: {}]
  %s7 = sld [smem:[#allocation0]]
  $region42: #{residual_block_apply.1} parent=0
    _
  %s9 = ssub.s32 1, %s7
  %s10 = scalar_select 0, %s9, %s7
  %11 = sst [smem:[#allocation2]] %s5
  $region1: #{residual_block_apply.1} parent=0
    #allocation3 [shape = 'u8[65536]{0}', space=vmem, size = 0x10000, scoped, tag = 'input window, operand 1, single buffered']
    #allocation4 [shape = 's32[1]{0}', space=sflag, size = 0x4, scoped, tag = 'scoped memory for residual_block_apply.1']
    #allocation5 [shape = 's32[1]{0}', space=sflag, size = 0x4, scoped, tag = 'scoped memory for residual_block_apply.1']
    #allocation6 [shape = 'u8[65536]{0}', space=vmem, size = 0x10000, scoped, tag = 'input window, operand 2, single buffered']
    #allocation7 [shape = 's32[1]{0}', space=sflag, size = 0x4, scoped, tag = 'scoped memory for residual_block_apply.1']
    #allocation8 [shape = 'u8[4096]{0}', space=vmem, size = 0x1000, scoped, tag = 'output window, operand 0, single buffered']
    %12 = vsyncpa [#allocation4], 0
    %13 = vsyncpa [#allocation7], 0
    %14 = vsyncpa [#allocation5], 0
    // Predicated region
    $region2: #{residual_block_apply.1} parent=1 // pred_check
      _
    $region3: #{residual_block_apply.1} parent=1 // pred_check_branch
      %16 = sbr.rel (0) target = $region5
    $region4: #{residual_block_apply.1} parent=1 // pred_region
      _
    $region5: #{residual_block_apply.1} parent=1 // pred_fallthru
      _
    // Predicated region
    $region6: #{residual_block_apply.1} parent=1 // pred_check
      _
    $region7: #{residual_block_apply.1} parent=1 // pred_check_branch
      %18 = sbr.rel (0) target = $region9
    $region8: #{residual_block_apply.1} parent=1 // pred_region
      %s20 = ssub.s32 2048, 2048
      %21 = vsyncadd [#allocation4], %s20
      %s22 = sshll.u32 [#allocation3], 4
      %s23 = int_to_ptr.vmem [resolvable:$true] %s22
      %28 = dma.hbm_to_vmem [thread:$0]  %s1, 2048, %s23, [#allocation4], 128, 128, 8
    $region9: #{residual_block_apply.1} parent=1 // pred_fallthru
      _
    // Predicated region
    $region10: #{residual_block_apply.1} parent=1 // pred_check
      _
    $region11: #{residual_block_apply.1} parent=1 // pred_check_branch
      %30 = sbr.rel (0) target = $region13
    $region12: #{residual_block_apply.1} parent=1 // pred_region
      %s32 = ssub.s32 2048, 2048
      %33 = vsyncadd [#allocation7], %s32
      %s34 = sshll.u32 [#allocation6], 4
      %s35 = int_to_ptr.vmem [resolvable:$true] %s34
      %40 = dma.hbm_to_vmem [thread:$0]  %s2, 2048, %s35, [#allocation7], 128, 128, 8
    $region13: #{residual_block_apply.1} parent=1 // pred_fallthru
      _
    // Predicated region
    $region14: #{residual_block_apply.1} parent=1 // pred_check
      _
    $region15: #{residual_block_apply.1} parent=1 // pred_check_branch
      %42 = sbr.rel (0) target = $region17
    $region16: #{residual_block_apply.1} parent=1 // pred_region
      _
    $region17: #{residual_block_apply.1} parent=1 // pred_fallthru
      _
    // Predicated region
    $region18: #{residual_block_apply.1} parent=1 // pred_check
      _
    $region19: #{residual_block_apply.1} parent=1 // pred_check_branch
      %44 = sbr.rel (0) target = $region21
    $region20: #{residual_block_apply.1} parent=1 // pred_region
      _
    $region21: #{residual_block_apply.1} parent=1 // pred_fallthru
      _
    // Predicated region
    $region22: #{residual_block_apply.1} parent=1 // pred_check
      _
    $region23: #{residual_block_apply.1} parent=1 // pred_check_branch
      %46 = sbr.rel (0) target = $region25
    $region24: #{residual_block_apply.1} parent=1 // pred_region
      _
    $region25: #{residual_block_apply.1} parent=1 // pred_fallthru
      _
    // Predicated region
    $region26: #{residual_block_apply.1} parent=1 // pred_check
      _
    $region27: #{residual_block_apply.1} parent=1 // pred_check_branch
      %48 = sbr.rel (0) target = $region29
    $region28: #{residual_block_apply.1} parent=1 // pred_region
      %49 = dma.done [#allocation4], 2048
    $region29: #{residual_block_apply.1} parent=1 // pred_fallthru
      _
    // Predicated region
    $region30: #{residual_block_apply.1} parent=1 // pred_check
      _
    $region31: #{residual_block_apply.1} parent=1 // pred_check_branch
      %51 = sbr.rel (0) target = $region33
    $region32: #{residual_block_apply.1} parent=1 // pred_region
      %52 = dma.done [#allocation7], 2048
    $region33: #{residual_block_apply.1} parent=1 // pred_fallthru
      _
    %v53 = vld [vmem:[%s0] sm:$0xff]
    %v54 = vld [vmem:[#allocation3] sm:$0xff]
    %v55 = vld [vmem:[#allocation3 + $0x8] sm:$0xff]
    %v56 = vld [vmem:[#allocation3 + $0x10] sm:$0xff]
    %v57 = vld [vmem:[#allocation3 + $0x18] sm:$0xff]
    %v58 = vld [vmem:[#allocation3 + $0x20] sm:$0xff]
    %v59 = vld [vmem:[#allocation3 + $0x28] sm:$0xff]
    %v60 = vld [vmem:[#allocation3 + $0x30] sm:$0xff]
    %v61 = vld [vmem:[#allocation3 + $0x38] sm:$0xff]
    %v62 = vld [vmem:[#allocation3 + $0x40] sm:$0xff]
    %v63 = vld [vmem:[#allocation3 + $0x48] sm:$0xff]
    %v64 = vld [vmem:[#allocation3 + $0x50] sm:$0xff]
    %v65 = vld [vmem:[#allocation3 + $0x58] sm:$0xff]
    %v66 = vld [vmem:[#allocation3 + $0x60] sm:$0xff]
    %v67 = vld [vmem:[#allocation3 + $0x68] sm:$0xff]
    %v68 = vld [vmem:[#allocation3 + $0x70] sm:$0xff]
    %v69 = vld [vmem:[#allocation3 + $0x78] sm:$0xff]
    %v70 = vld [vmem:[%s3] sm:$0x1]
    %v72 = vlaneseq
    %v73 = vshrl.u32 %v72, 7
    %v74 = vsub.s32 0, %v73
    %v75 = vrot.slane %v70, %v74
    %77 = vmatprep.subr.mxu0 0.0
    %78 = vmatpush1.msra.mxu0 %v54
    %79 = vmatprep.subr.mxu0 0.0
    %80 = vmatpush1.msra.mxu0 %v55
    %81 = vmatprep.subr.mxu0 0.0
    %82 = vmatpush1.msra.mxu0 %v56
    %83 = vmatprep.subr.mxu0 0.0
    %84 = vmatpush1.msra.mxu0 %v57
    %85 = vmatprep.subr.mxu0 0.0
    %86 = vmatpush1.msra.mxu0 %v58
    %87 = vmatprep.subr.mxu0 0.0
    %88 = vmatpush1.msra.mxu0 %v59
    %89 = vmatprep.subr.mxu0 0.0
    %90 = vmatpush1.msra.mxu0 %v60
    %91 = vmatprep.subr.mxu0 0.0
    %92 = vmatpush1.msra.mxu0 %v61
    %93 = vmatprep.subr.mxu0 0.0
    %94 = vmatpush1.msra.mxu0 %v62
    %95 = vmatprep.subr.mxu0 0.0
    %96 = vmatpush1.msra.mxu0 %v63
    %97 = vmatprep.subr.mxu0 0.0
    %98 = vmatpush1.msra.mxu0 %v64
    %99 = vmatprep.subr.mxu0 0.0
    %100 = vmatpush1.msra.mxu0 %v65
    %101 = vmatprep.subr.mxu0 0.0
    %102 = vmatpush1.msra.mxu0 %v66
    %103 = vmatprep.subr.mxu0 0.0
    %104 = vmatpush1.msra.mxu0 %v67
    %105 = vmatprep.subr.mxu0 0.0
    %106 = vmatpush1.msra.mxu0 %v68
    %107 = vmatprep.subr.mxu0 0.0
    %108 = vmatpush1.msra.mxu0 %v69
    %109 = vmatprep.subr.mxu0 0.0
    %110 = vmatpush1.msra.mxu0 0.0
    %111 = vmatprep.subr.mxu0 0.0
    %112 = vmatpush1.msra.mxu0 0.0
    %113 = vmatprep.subr.mxu0 0.0
    %114 = vmatpush1.msra.mxu0 0.0
    %115 = vmatprep.subr.mxu0 0.0
    %116 = vmatpush1.msra.mxu0 0.0
    %117 = vmatprep.subr.mxu0 0.0
    %118 = vmatpush1.msra.mxu0 0.0
    %119 = vmatprep.subr.mxu0 0.0
    %120 = vmatpush1.msra.mxu0 0.0
    %121 = vmatprep.subr.mxu0 0.0
    %122 = vmatpush1.msra.mxu0 0.0
    %123 = vmatprep.subr.mxu0 0.0
    %124 = vmatpush1.msra.mxu0 0.0
    %125 = vmatprep.subr.mxu0 0.0
    %126 = vmatpush1.msra.mxu0 0.0
    %127 = vmatprep.subr.mxu0 0.0
    %128 = vmatpush1.msra.mxu0 0.0
    %129 = vmatprep.subr.mxu0 0.0
    %130 = vmatpush1.msra.mxu0 0.0
    %131 = vmatprep.subr.mxu0 0.0
    %132 = vmatpush1.msra.mxu0 0.0
    %133 = vmatprep.subr.mxu0 0.0
    %134 = vmatpush1.msra.mxu0 0.0
    %135 = vmatprep.subr.mxu0 0.0
    %136 = vmatpush1.msra.mxu0 0.0
    %137 = vmatprep.subr.mxu0 0.0
    %138 = vmatpush1.msra.mxu0 0.0
    %139 = vmatprep.subr.mxu0 0.0
    %140 = vmatpush1.msra.mxu0 0.0
    %141 = vmatprep.mubr.f32.mxu0 0.0
    %142 = vmatmul.mubr.f32.gmra.mrb[0].mxu0 %v53
    %v143 = vpop.f32.mrb[0].mxu0
    %v144 = vadd.f32 %v75, %v143
    %v145 = vpop.f32.mrb[0].mxu0
    %146 = vdwg.mxu0
    %v147 = vld [vmem:[#allocation6] sm:$0xff]
    %v148 = vld [vmem:[#allocation6 + $0x8] sm:$0xff]
    %v149 = vld [vmem:[#allocation6 + $0x10] sm:$0xff]
    %v150 = vld [vmem:[#allocation6 + $0x18] sm:$0xff]
    %v151 = vld [vmem:[#allocation6 + $0x20] sm:$0xff]
    %v152 = vld [vmem:[#allocation6 + $0x28] sm:$0xff]
    %v153 = vld [vmem:[#allocation6 + $0x30] sm:$0xff]
    %v154 = vld [vmem:[#allocation6 + $0x38] sm:$0xff]
    %v155 = vld [vmem:[#allocation6 + $0x40] sm:$0xff]
    %v156 = vld [vmem:[#allocation6 + $0x48] sm:$0xff]
    %v157 = vld [vmem:[#allocation6 + $0x50] sm:$0xff]
    %v158 = vld [vmem:[#allocation6 + $0x58] sm:$0xff]
    %v159 = vld [vmem:[#allocation6 + $0x60] sm:$0xff]
    %v160 = vld [vmem:[#allocation6 + $0x68] sm:$0xff]
    %v161 = vld [vmem:[#allocation6 + $0x70] sm:$0xff]
    %v162 = vld [vmem:[#allocation6 + $0x78] sm:$0xff]
    %v163 = vld [vmem:[%s4] sm:$0x1]
    %v165 = vlaneseq
    %v166 = vshrl.u32 %v165, 7
    %v167 = vsub.s32 0, %v166
    %v168 = vrot.slane %v163, %v167
    %170 = vmatprep.subr.mxu0 0.0
    %171 = vmatpush1.msra.mxu0 %v147
    %172 = vmatprep.subr.mxu0 0.0
    %173 = vmatpush1.msra.mxu0 %v148
    %174 = vmatprep.subr.mxu0 0.0
    %175 = vmatpush1.msra.mxu0 %v149
    %176 = vmatprep.subr.mxu0 0.0
    %177 = vmatpush1.msra.mxu0 %v150
    %178 = vmatprep.subr.mxu0 0.0
    %179 = vmatpush1.msra.mxu0 %v151
    %180 = vmatprep.subr.mxu0 0.0
    %181 = vmatpush1.msra.mxu0 %v152
    %182 = vmatprep.subr.mxu0 0.0
    %183 = vmatpush1.msra.mxu0 %v153
    %184 = vmatprep.subr.mxu0 0.0
    %185 = vmatpush1.msra.mxu0 %v154
    %186 = vmatprep.subr.mxu0 0.0
    %187 = vmatpush1.msra.mxu0 %v155
    %188 = vmatprep.subr.mxu0 0.0
    %189 = vmatpush1.msra.mxu0 %v156
    %190 = vmatprep.subr.mxu0 0.0
    %191 = vmatpush1.msra.mxu0 %v157
    %192 = vmatprep.subr.mxu0 0.0
    %193 = vmatpush1.msra.mxu0 %v158
    %194 = vmatprep.subr.mxu0 0.0
    %195 = vmatpush1.msra.mxu0 %v159
    %196 = vmatprep.subr.mxu0 0.0
    %197 = vmatpush1.msra.mxu0 %v160
    %198 = vmatprep.subr.mxu0 0.0
    %199 = vmatpush1.msra.mxu0 %v161
    %200 = vmatprep.subr.mxu0 0.0
    %201 = vmatpush1.msra.mxu0 %v162
    %202 = vmatprep.subr.mxu0 0.0
    %203 = vmatpush1.msra.mxu0 0.0
    %204 = vmatprep.subr.mxu0 0.0
    %205 = vmatpush1.msra.mxu0 0.0
    %206 = vmatprep.subr.mxu0 0.0
    %207 = vmatpush1.msra.mxu0 0.0
    %208 = vmatprep.subr.mxu0 0.0
    %209 = vmatpush1.msra.mxu0 0.0
    %210 = vmatprep.subr.mxu0 0.0
    %211 = vmatpush1.msra.mxu0 0.0
    %212 = vmatprep.subr.mxu0 0.0
    %213 = vmatpush1.msra.mxu0 0.0
    %214 = vmatprep.subr.mxu0 0.0
    %215 = vmatpush1.msra.mxu0 0.0
    %216 = vmatprep.subr.mxu0 0.0
    %217 = vmatpush1.msra.mxu0 0.0
    %218 = vmatprep.subr.mxu0 0.0
    %219 = vmatpush1.msra.mxu0 0.0
    %220 = vmatprep.subr.mxu0 0.0
    %221 = vmatpush1.msra.mxu0 0.0
    %222 = vmatprep.subr.mxu0 0.0
    %223 = vmatpush1.msra.mxu0 0.0
    %224 = vmatprep.subr.mxu0 0.0
    %225 = vmatpush1.msra.mxu0 0.0
    %226 = vmatprep.subr.mxu0 0.0
    %227 = vmatpush1.msra.mxu0 0.0
    %228 = vmatprep.subr.mxu0 0.0
    %229 = vmatpush1.msra.mxu0 0.0
    %230 = vmatprep.subr.mxu0 0.0
    %231 = vmatpush1.msra.mxu0 0.0
    %232 = vmatprep.subr.mxu0 0.0
    %233 = vmatpush1.msra.mxu0 0.0
    %234 = vmatprep.mubr.f32.mxu0 0.0
    %235 = vmatmul.mubr.f32.gmra.mrb[0].mxu0 %v53
    %v236 = vpop.f32.mrb[0].mxu0
    %v237 = vadd.f32 %v168, %v236
    %v238 = vpop.f32.mrb[0].mxu0
    %239 = vdwg.mxu0
    %s240 = sld [smem:[#allocation2]]
    %vm241 = vcmp.ge.f32.partialorder %v144, 0.0
    %v242 = vstv %s240
    %v243 = vmul.f32 %v242, %v144
    %v244 = vsel %vm241, %v144, %v243
    %v245 = vadd.f32 %v244, %v237
    %246 = vst [vmem:[#allocation8] sm:$0xff] %v245
    // Predicated region
    $region34: #{residual_block_apply.1} parent=1 // pred_check
      _
    $region35: #{residual_block_apply.1} parent=1 // pred_check_branch
      %248 = sbr.rel (0) target = $region37
    $region36: #{residual_block_apply.1} parent=1 // pred_region
      %s250 = ssub.s32 128, 128
      %251 = vsyncadd [#allocation5], %s250
      %s253 = sshll.u32 [#allocation8], 4
      %s254 = int_to_ptr.vmem [resolvable:$true] %s253
      %256 = dma.vmem_to_hbm [thread:$0]  %s254, 128, %s6, [#allocation5]
    $region37: #{residual_block_apply.1} parent=1 // pred_fallthru
      _
    // Predicated region
    $region38: #{residual_block_apply.1} parent=1 // pred_check
      _
    $region39: #{residual_block_apply.1} parent=1 // pred_check_branch
      %258 = sbr.rel (0) target = $region41
    $region40: #{residual_block_apply.1} parent=1 // pred_region
      %259 = dma.done [#allocation5], 128
    $region41: #{residual_block_apply.1} parent=1 // pred_fallthru
      _
    %260 = vsyncpa [#allocation4], 1
    %261 = vsyncpa [#allocation7], 1
    %262 = vsyncpa [#allocation5], 1

</llo_original>
